<compile_context>
chip_gen: v5e
topology: v5e:2x2
jax: 0.10.0
libtpu: 0.0.40
codegen_flags: <defaults>
</compile_context>

<pallas_src>
import functools

import jax
import jax.numpy as jnp
from jax.experimental import pallas as pl
from jax.experimental.pallas import tpu as pltpu


def gat_fused_kernel(x_ref, adj_ref, w1_ref, wv1_ref, b1_ref,
                     w2_ref, wv2_ref, b2_ref, out_ref,
                     *, num_heads, f_out, num_classes):
    """Whole GATModel forward (eval mode) for one small graph.

    x_ref   : (N, Fin)            node features (f32)
    adj_ref : (N, N)              dense mask, adj[i, j] = 1 iff edge j -> i (incl. self)
    w1_ref  : (Fin, H*Fout + H)   bf16: per-head projections then per-head a_src columns
    wv1_ref : (H, Fin)            bf16: row h = (W_h @ a_dst_h^T)^T
    b1_ref  : (1, H*Fout)         conv1 bias (concat layout)
    w2_ref  : (H*Fout, C + 1)     bf16: conv2 projection + a_src column
    wv2_ref : (1, H*Fout)         bf16: (W2 @ a2_dst^T)^T
    b2_ref  : (1, C)              conv2 bias
    out_ref : (N, C)              log_softmax output
    """
    f32 = jnp.float32
    bf16 = jnp.bfloat16
    neg_big = f32(-1e30)
    hf = num_heads * f_out

    x = x_ref[...].astype(bf16)                                    # (N, Fin)
    live = adj_ref[...] > 0                                        # (N, N) bool

    # ---------------- conv1: all heads in one MXU pass ----------------
    proj1 = jnp.dot(x, w1_ref[...], preferred_element_type=f32)    # (N, HF + H)
    # v_rows[h, j] = a_dst_h . (W_h x_j): node index lands on the lane axis.
    vrows1 = jax.lax.dot_general(wv1_ref[...], x,
                                 (((1,), (1,)), ((), ())),
                                 preferred_element_type=f32)       # (H, N)

    h_all = proj1[:, :hf]                                          # (N, HF) = concat_h(X @ W_h)
    h_all_bf = h_all.astype(bf16)

    head_outs = []
    for h in range(num_heads):
        u = proj1[:, hf + h:hf + h + 1]                            # (N, 1)  a_src . h_i
        v = vrows1[h:h + 1, :]                                     # (1, N)  a_dst . h_j
        s = u + v                                                  # (N, N)
        s = jnp.where(s > 0, s, 0.2 * s)                           # LeakyReLU(0.2)
        s = jnp.where(live, s, neg_big)                            # mask non-edges (single mask)
        m = jnp.max(s, axis=-1, keepdims=True)
        p = jnp.exp(s - m)                                         # unnormalized attention
        denom = jnp.maximum(jnp.sum(p, axis=-1, keepdims=True), f32(1e-30))
        agg = jnp.dot(p.astype(bf16),
                      h_all_bf[:, h * f_out:(h + 1) * f_out],
                      preferred_element_type=f32)                  # (N, Fout)
        # deferred normalization: one EUP reciprocal + N*Fout multiplies
        head_outs.append(agg * pl.reciprocal(denom, approx=True))

    x1 = jnp.concatenate(head_outs, axis=-1) + b1_ref[...]         # (N, HF), lane-dense concat
    x1 = jnp.where(x1 > 0, x1, jnp.exp(x1) - 1.0)                  # ELU (alpha = 1)
    x1_bf = x1.astype(bf16)

    # ---------------- conv2: single head + log_softmax ----------------
    proj2 = jnp.dot(x1_bf, w2_ref[...], preferred_element_type=f32)   # (N, C + 1)
    vrow2 = jax.lax.dot_general(wv2_ref[...], x1_bf,
                                (((1,), (1,)), ((), ())),
                                preferred_element_type=f32)           # (1, N)
    h2 = proj2[:, :num_classes]                                       # (N, C)
    u2 = proj2[:, num_classes:num_classes + 1]                        # (N, 1)
    s2 = u2 + vrow2
    s2 = jnp.where(s2 > 0, s2, 0.2 * s2)
    s2 = jnp.where(live, s2, neg_big)
    m2 = jnp.max(s2, axis=-1, keepdims=True)
    p2 = jnp.exp(s2 - m2)
    denom2 = jnp.maximum(jnp.sum(p2, axis=-1, keepdims=True), f32(1e-30))
    o2 = jnp.dot(p2.astype(bf16), h2.astype(bf16), preferred_element_type=f32)
    o2 = o2 * pl.reciprocal(denom2, approx=True) + b2_ref[...]        # (N, C)

    # log_softmax(dim=1), computed in f32
    mm = jnp.max(o2, axis=-1, keepdims=True)
    z = o2 - mm
    lse = jnp.log(jnp.sum(jnp.exp(z), axis=-1, keepdims=True))
    out_ref[...] = (z - lse).astype(out_ref.dtype)


def _fold_head_params(w, a_src, a_dst, dtype=jnp.bfloat16):
    """Fold attention vectors into the projection weights.

    w: (H, Fin, Fout), a_src: (H, Fout, 1), a_dst: (H, 1, Fout).
    Returns:
      w_aug: (Fin, H*Fout + H)  cols [h*Fout:(h+1)*Fout] = W_h, col H*Fout+h = W_h @ a_src_h
      wv   : (H, Fin)           row h = (W_h @ a_dst_h^T)^T
    """
    num_heads, f_in, f_out = w.shape
    w_cat = jnp.transpose(w, (1, 0, 2)).reshape(f_in, num_heads * f_out)   # (Fin, H*Fout)
    wu = jnp.matmul(w, a_src)[..., 0]                                      # (H, Fin)
    wv = jnp.matmul(w, jnp.swapaxes(a_dst, 1, 2))[..., 0]                  # (H, Fin)
    w_aug = jnp.concatenate([w_cat, wu.T], axis=1)                         # (Fin, H*Fout + H)
    return w_aug.astype(dtype), wv.astype(dtype)


def gat_model_forward(x, adj, params):
    """GATModel.forward in eval mode (dropout = identity), one fused pallas_call."""
    n, f_in = x.shape
    num_heads, _, f_out = params["w1"].shape
    num_classes = params["w2"].shape[-1]
    hf = num_heads * f_out

    w1_aug, wv1 = _fold_head_params(params["w1"], params["a1_src"], params["a1_dst"])
    w2_aug, wv2 = _fold_head_params(params["w2"], params["a2_src"], params["a2_dst"])
    b1 = params["b1"].reshape(1, hf).astype(jnp.float32)
    b2 = params["b2"].reshape(1, num_classes).astype(jnp.float32)

    kernel = functools.partial(gat_fused_kernel,
                               num_heads=num_heads,
                               f_out=f_out,
                               num_classes=num_classes)

    return pl.pallas_call(
        kernel,
        out_shape=jax.ShapeDtypeStruct((n, num_classes), jnp.float32),
        grid=(1,),
        in_specs=[
            pl.BlockSpec((n, f_in), lambda i: (0, 0)),            # x
            pl.BlockSpec((n, n), lambda i: (0, 0)),               # adjacency
            pl.BlockSpec(w1_aug.shape, lambda i: (0, 0)),         # W1 (+ folded a_src)
            pl.BlockSpec(wv1.shape, lambda i: (0, 0)),            # W1 @ a_dst rows
            pl.BlockSpec((1, hf), lambda i: (0, 0)),              # bias1
            pl.BlockSpec(w2_aug.shape, lambda i: (0, 0)),         # W2 (+ folded a_src)
            pl.BlockSpec(wv2.shape, lambda i: (0, 0)),            # W2 @ a_dst row
            pl.BlockSpec((1, num_classes), lambda i: (0, 0)),     # bias2
        ],
        out_specs=pl.BlockSpec((n, num_classes), lambda i: (0, 0)),
        compiler_params=pltpu.CompilerParams(
            dimension_semantics=("arbitrary",)),
    )(x, adj, w1_aug, wv1, b1, w2_aug, wv2, b2)


def init_params(key, num_in, num_out, num_heads, num_classes):
    def glorot(k, shape, fan_in, fan_out):
        lim = jnp.sqrt(6.0 / (fan_in + fan_out))
        return jax.random.uniform(k, shape, jnp.float32, -lim, lim)

    k = jax.random.split(key, 6)
    hidden = num_out * num_heads
    return {
        # conv1: per-head projection + attention vectors (a split into src/dst halves)
        "w1": glorot(k[0], (num_heads, num_in, num_out), num_in, num_out),
        "a1_src": glorot(k[1], (num_heads, num_out, 1), 2 * num_out, 1),
        "a1_dst": glorot(k[2], (num_heads, 1, num_out), 2 * num_out, 1),
        "b1": jnp.zeros((num_heads * num_out,), jnp.float32),   # GATConv bias (zero init)
        # conv2: single head
        "w2": glorot(k[3], (1, hidden, num_classes), hidden, num_classes),
        "a2_src": glorot(k[4], (1, num_classes, 1), 2 * num_classes, 1),
        "a2_dst": glorot(k[5], (1, 1, num_classes), 2 * num_classes, 1),
        "b2": jnp.zeros((num_classes,), jnp.float32),
    }


def build_adjacency(edge_index, num_nodes):
    """Dense mask adj[i, j] = 1 iff edge j -> i (edge_index = [src; dst]), + self loops.

    Invariant: self-loops guarantee every row has at least one live entry, so the
    masked softmax denominator is always >= 1.
    """
    src, dst = edge_index[0], edge_index[1]
    adj = jnp.zeros((num_nodes, num_nodes), jnp.float32).at[dst, src].set(1.0)
    adj = jnp.maximum(adj, jnp.eye(num_nodes, dtype=jnp.float32))
    return adj


if __name__ == "__main__":
    # Small synthetic problem.
    N = 16                 # nodes
    F_IN = 8               # num_input_features
    F_OUT = 8              # num_output_features (per head)
    HEADS = 4              # num_heads
    CLASSES = 4            # num_classes

    key = jax.random.PRNGKey(0)
    k_x, k_e, k_p = jax.random.split(key, 3)

    # data.x
    x = jax.random.normal(k_x, (N, F_IN), jnp.float32)

    # data.edge_index: a bidirectional ring plus some random edges, shape (2, E).
    idx = jnp.arange(N, dtype=jnp.int32)
    ring_src = jnp.concatenate([idx, (idx + 1) % N])
    ring_dst = jnp.concatenate([(idx + 1) % N, idx])
    rand_src = jax.random.randint(jax.random.fold_in(k_e, 0), (N,), 0, N, jnp.int32)
    rand_dst = jax.random.randint(jax.random.fold_in(k_e, 1), (N,), 0, N, jnp.int32)
    edge_index = jnp.stack([jnp.concatenate([ring_src, rand_src]),
                            jnp.concatenate([ring_dst, rand_dst])])   # (2, 48)

    adj = build_adjacency(edge_index, N)
    params = init_params(k_p, F_IN, F_OUT, HEADS, CLASSES)

    out = jax.jit(gat_model_forward)(x, adj, params)
    out = jax.block_until_ready(out)

    # Sanity: log_softmax rows must exponentiate-sum to 1 and be finite.
    assert out.shape == (N, CLASSES)
    assert bool(jnp.all(jnp.isfinite(out)))
    row_sums = jnp.sum(jnp.exp(out), axis=1)
    assert bool(jnp.all(jnp.abs(row_sums - 1.0) < 1e-4))

    print("KERNEL_OK")
</pallas_src>

<mosaic_0001>
module attributes {stable_mosaic.version = 11 : i64} {
  func.func @gat_fused_kernel(%arg0: i32, %arg1: memref<16x8xf32, #tpu.memory_space<vmem>>, %arg2: memref<16x16xf32, #tpu.memory_space<vmem>>, %arg3: memref<8x36xbf16, #tpu.memory_space<vmem>>, %arg4: memref<4x8xbf16, #tpu.memory_space<vmem>>, %arg5: memref<1x32xf32, #tpu.memory_space<vmem>>, %arg6: memref<32x5xbf16, #tpu.memory_space<vmem>>, %arg7: memref<1x32xbf16, #tpu.memory_space<vmem>>, %arg8: memref<1x4xf32, #tpu.memory_space<vmem>>, %arg9: memref<16x4xf32, #tpu.memory_space<vmem>>) attributes {dimension_semantics = [#tpu.dimension_semantics<arbitrary>], iteration_bounds = array<i64: 1>, scalar_prefetch = 0 : i64, scratch_operands = 0 : i64, tpu.core_type = #tpu.core_type<tc>, window_params = [{pipeline_mode = #tpu.pipeline_mode<synchronous>, transform_indices = @transform_0, window_bounds = array<i64: 16, 8>}, {pipeline_mode = #tpu.pipeline_mode<synchronous>, transform_indices = @transform_1, window_bounds = array<i64: 16, 16>}, {pipeline_mode = #tpu.pipeline_mode<synchronous>, transform_indices = @transform_2, window_bounds = array<i64: 8, 36>}, {pipeline_mode = #tpu.pipeline_mode<synchronous>, transform_indices = @transform_3, window_bounds = array<i64: 4, 8>}, {pipeline_mode = #tpu.pipeline_mode<synchronous>, transform_indices = @transform_4, window_bounds = array<i64: 1, 32>}, {pipeline_mode = #tpu.pipeline_mode<synchronous>, transform_indices = @transform_5, window_bounds = array<i64: 32, 5>}, {pipeline_mode = #tpu.pipeline_mode<synchronous>, transform_indices = @transform_6, window_bounds = array<i64: 1, 32>}, {pipeline_mode = #tpu.pipeline_mode<synchronous>, transform_indices = @transform_7, window_bounds = array<i64: 1, 4>}, {pipeline_mode = #tpu.pipeline_mode<synchronous>, transform_indices = @transform_8, window_bounds = array<i64: 16, 4>}]} {
    %c0 = arith.constant 0 : index
    %c0_0 = arith.constant 0 : index
    %0 = vector.load %arg1[%c0, %c0_0] : memref<16x8xf32, #tpu.memory_space<vmem>>, vector<16x8xf32>
    %1 = arith.truncf %0 : vector<16x8xf32> to vector<16x8xbf16>
    %c0_1 = arith.constant 0 : index
    %c0_2 = arith.constant 0 : index
    %2 = vector.load %arg2[%c0_1, %c0_2] : memref<16x16xf32, #tpu.memory_space<vmem>>, vector<16x16xf32>
    %cst = arith.constant 0.000000e+00 : f32
    %3 = vector.broadcast %cst : f32 to vector<16x16xf32>
    %4 = arith.cmpf ogt, %2, %3 : vector<16x16xf32>
    %c0_3 = arith.constant 0 : index
    %c0_4 = arith.constant 0 : index
    %5 = vector.load %arg3[%c0_3, %c0_4] : memref<8x36xbf16, #tpu.memory_space<vmem>>, vector<8x36xbf16>
    %cst_5 = arith.constant dense<0.000000e+00> : vector<16x36xf32>
    %6 = tpu.matmul %1, %5, %cst_5 {dimension_numbers = #tpu.dot_dimension_numbers<[1], [0], [0], [1], [0, 0, 1, 1], [], []>} : vector<16x8xbf16>, vector<8x36xbf16>, vector<16x36xf32> -> vector<16x36xf32>
    %c0_6 = arith.constant 0 : index
    %c0_7 = arith.constant 0 : index
    %7 = vector.load %arg4[%c0_6, %c0_7] : memref<4x8xbf16, #tpu.memory_space<vmem>>, vector<4x8xbf16>
    %cst_8 = arith.constant dense<0.000000e+00> : vector<4x16xf32>
    %8 = tpu.matmul %7, %1, %cst_8 {dimension_numbers = #tpu.dot_dimension_numbers<[1], [1], [0], [0], [0, 0, 1, 0], [], []>} : vector<4x8xbf16>, vector<16x8xbf16>, vector<4x16xf32> -> vector<4x16xf32>
    %9 = vector.extract_strided_slice %6 {offsets = [0, 0], sizes = [16, 32], strides = [1, 1]} : vector<16x36xf32> to vector<16x32xf32>
    %10 = arith.truncf %9 : vector<16x32xf32> to vector<16x32xbf16>
    %11 = vector.extract_strided_slice %6 {offsets = [0, 32], sizes = [16, 1], strides = [1, 1]} : vector<16x36xf32> to vector<16x1xf32>
    %12 = vector.extract_strided_slice %8 {offsets = [0, 0], sizes = [1, 16], strides = [1, 1]} : vector<4x16xf32> to vector<1x16xf32>
    %13 = vector.broadcast %11 : vector<16x1xf32> to vector<16x16xf32>
    %14 = vector.broadcast %12 : vector<1x16xf32> to vector<16x16xf32>
    %15 = arith.addf %13, %14 : vector<16x16xf32>
    %cst_9 = arith.constant 0.000000e+00 : f32
    %16 = vector.broadcast %cst_9 : f32 to vector<16x16xf32>
    %17 = arith.cmpf ogt, %15, %16 : vector<16x16xf32>
    %cst_10 = arith.constant 2.000000e-01 : f32
    %18 = vector.broadcast %cst_10 : f32 to vector<16x16xf32>
    %19 = arith.mulf %18, %15 : vector<16x16xf32>
    %20 = arith.select %17, %15, %19 : vector<16x16xi1>, vector<16x16xf32>
    %cst_11 = arith.constant -1.000000e+30 : f32
    %21 = vector.broadcast %cst_11 : f32 to vector<16x16xf32>
    %22 = arith.select %4, %20, %21 : vector<16x16xi1>, vector<16x16xf32>
    %cst_12 = arith.constant dense<0xFF800000> : vector<16xf32>
    %23 = vector.multi_reduction <maximumf>, %22, %cst_12 [1] : vector<16x16xf32> to vector<16xf32>
    %24 = vector.shape_cast %23 : vector<16xf32> to vector<16x1xf32>
    %25 = vector.broadcast %24 : vector<16x1xf32> to vector<16x16xf32>
    %26 = arith.subf %22, %25 : vector<16x16xf32>
    %27 = math.exp %26 : vector<16x16xf32>
    %cst_13 = arith.constant dense<0.000000e+00> : vector<16xf32>
    %28 = vector.multi_reduction <add>, %27, %cst_13 [1] : vector<16x16xf32> to vector<16xf32>
    %29 = vector.shape_cast %28 : vector<16xf32> to vector<16x1xf32>
    %cst_14 = arith.constant 1.000000e-30 : f32
    %30 = vector.broadcast %cst_14 : f32 to vector<16x1xf32>
    %31 = arith.maximumf %29, %30 : vector<16x1xf32>
    %32 = arith.truncf %27 : vector<16x16xf32> to vector<16x16xbf16>
    %33 = vector.extract_strided_slice %10 {offsets = [0, 0], sizes = [16, 8], strides = [1, 1]} : vector<16x32xbf16> to vector<16x8xbf16>
    %cst_15 = arith.constant dense<0.000000e+00> : vector<16x8xf32>
    %34 = tpu.matmul %32, %33, %cst_15 {dimension_numbers = #tpu.dot_dimension_numbers<[1], [0], [0], [1], [0, 0, 1, 1], [], []>} : vector<16x16xbf16>, vector<16x8xbf16>, vector<16x8xf32> -> vector<16x8xf32>
    %35 = tpu.reciprocal %31 {approx = true} : vector<16x1xf32> -> vector<16x1xf32>
    %36 = vector.broadcast %35 : vector<16x1xf32> to vector<16x8xf32>
    %37 = arith.mulf %34, %36 : vector<16x8xf32>
    %38 = vector.extract_strided_slice %6 {offsets = [0, 33], sizes = [16, 1], strides = [1, 1]} : vector<16x36xf32> to vector<16x1xf32>
    %39 = vector.extract_strided_slice %8 {offsets = [1, 0], sizes = [1, 16], strides = [1, 1]} : vector<4x16xf32> to vector<1x16xf32>
    %40 = vector.broadcast %38 : vector<16x1xf32> to vector<16x16xf32>
    %41 = vector.broadcast %39 : vector<1x16xf32> to vector<16x16xf32>
    %42 = arith.addf %40, %41 : vector<16x16xf32>
    %cst_16 = arith.constant 0.000000e+00 : f32
    %43 = vector.broadcast %cst_16 : f32 to vector<16x16xf32>
    %44 = arith.cmpf ogt, %42, %43 : vector<16x16xf32>
    %cst_17 = arith.constant 2.000000e-01 : f32
    %45 = vector.broadcast %cst_17 : f32 to vector<16x16xf32>
    %46 = arith.mulf %45, %42 : vector<16x16xf32>
    %47 = arith.select %44, %42, %46 : vector<16x16xi1>, vector<16x16xf32>
    %cst_18 = arith.constant -1.000000e+30 : f32
    %48 = vector.broadcast %cst_18 : f32 to vector<16x16xf32>
    %49 = arith.select %4, %47, %48 : vector<16x16xi1>, vector<16x16xf32>
    %cst_19 = arith.constant dense<0xFF800000> : vector<16xf32>
    %50 = vector.multi_reduction <maximumf>, %49, %cst_19 [1] : vector<16x16xf32> to vector<16xf32>
    %51 = vector.shape_cast %50 : vector<16xf32> to vector<16x1xf32>
    %52 = vector.broadcast %51 : vector<16x1xf32> to vector<16x16xf32>
    %53 = arith.subf %49, %52 : vector<16x16xf32>
    %54 = math.exp %53 : vector<16x16xf32>
    %cst_20 = arith.constant dense<0.000000e+00> : vector<16xf32>
    %55 = vector.multi_reduction <add>, %54, %cst_20 [1] : vector<16x16xf32> to vector<16xf32>
    %56 = vector.shape_cast %55 : vector<16xf32> to vector<16x1xf32>
    %cst_21 = arith.constant 1.000000e-30 : f32
    %57 = vector.broadcast %cst_21 : f32 to vector<16x1xf32>
    %58 = arith.maximumf %56, %57 : vector<16x1xf32>
    %59 = arith.truncf %54 : vector<16x16xf32> to vector<16x16xbf16>
    %60 = vector.extract_strided_slice %10 {offsets = [0, 8], sizes = [16, 8], strides = [1, 1]} : vector<16x32xbf16> to vector<16x8xbf16>
    %cst_22 = arith.constant dense<0.000000e+00> : vector<16x8xf32>
    %61 = tpu.matmul %59, %60, %cst_22 {dimension_numbers = #tpu.dot_dimension_numbers<[1], [0], [0], [1], [0, 0, 1, 1], [], []>} : vector<16x16xbf16>, vector<16x8xbf16>, vector<16x8xf32> -> vector<16x8xf32>
    %62 = tpu.reciprocal %58 {approx = true} : vector<16x1xf32> -> vector<16x1xf32>
    %63 = vector.broadcast %62 : vector<16x1xf32> to vector<16x8xf32>
    %64 = arith.mulf %61, %63 : vector<16x8xf32>
    %65 = vector.extract_strided_slice %6 {offsets = [0, 34], sizes = [16, 1], strides = [1, 1]} : vector<16x36xf32> to vector<16x1xf32>
    %66 = vector.extract_strided_slice %8 {offsets = [2, 0], sizes = [1, 16], strides = [1, 1]} : vector<4x16xf32> to vector<1x16xf32>
    %67 = vector.broadcast %65 : vector<16x1xf32> to vector<16x16xf32>
    %68 = vector.broadcast %66 : vector<1x16xf32> to vector<16x16xf32>
    %69 = arith.addf %67, %68 : vector<16x16xf32>
    %cst_23 = arith.constant 0.000000e+00 : f32
    %70 = vector.broadcast %cst_23 : f32 to vector<16x16xf32>
    %71 = arith.cmpf ogt, %69, %70 : vector<16x16xf32>
    %cst_24 = arith.constant 2.000000e-01 : f32
    %72 = vector.broadcast %cst_24 : f32 to vector<16x16xf32>
    %73 = arith.mulf %72, %69 : vector<16x16xf32>
    %74 = arith.select %71, %69, %73 : vector<16x16xi1>, vector<16x16xf32>
    %cst_25 = arith.constant -1.000000e+30 : f32
    %75 = vector.broadcast %cst_25 : f32 to vector<16x16xf32>
    %76 = arith.select %4, %74, %75 : vector<16x16xi1>, vector<16x16xf32>
    %cst_26 = arith.constant dense<0xFF800000> : vector<16xf32>
    %77 = vector.multi_reduction <maximumf>, %76, %cst_26 [1] : vector<16x16xf32> to vector<16xf32>
    %78 = vector.shape_cast %77 : vector<16xf32> to vector<16x1xf32>
    %79 = vector.broadcast %78 : vector<16x1xf32> to vector<16x16xf32>
    %80 = arith.subf %76, %79 : vector<16x16xf32>
    %81 = math.exp %80 : vector<16x16xf32>
    %cst_27 = arith.constant dense<0.000000e+00> : vector<16xf32>
    %82 = vector.multi_reduction <add>, %81, %cst_27 [1] : vector<16x16xf32> to vector<16xf32>
    %83 = vector.shape_cast %82 : vector<16xf32> to vector<16x1xf32>
    %cst_28 = arith.constant 1.000000e-30 : f32
    %84 = vector.broadcast %cst_28 : f32 to vector<16x1xf32>
    %85 = arith.maximumf %83, %84 : vector<16x1xf32>
    %86 = arith.truncf %81 : vector<16x16xf32> to vector<16x16xbf16>
    %87 = vector.extract_strided_slice %10 {offsets = [0, 16], sizes = [16, 8], strides = [1, 1]} : vector<16x32xbf16> to vector<16x8xbf16>
    %cst_29 = arith.constant dense<0.000000e+00> : vector<16x8xf32>
    %88 = tpu.matmul %86, %87, %cst_29 {dimension_numbers = #tpu.dot_dimension_numbers<[1], [0], [0], [1], [0, 0, 1, 1], [], []>} : vector<16x16xbf16>, vector<16x8xbf16>, vector<16x8xf32> -> vector<16x8xf32>
    %89 = tpu.reciprocal %85 {approx = true} : vector<16x1xf32> -> vector<16x1xf32>
    %90 = vector.broadcast %89 : vector<16x1xf32> to vector<16x8xf32>
    %91 = arith.mulf %88, %90 : vector<16x8xf32>
    %92 = vector.extract_strided_slice %6 {offsets = [0, 35], sizes = [16, 1], strides = [1, 1]} : vector<16x36xf32> to vector<16x1xf32>
    %93 = vector.extract_strided_slice %8 {offsets = [3, 0], sizes = [1, 16], strides = [1, 1]} : vector<4x16xf32> to vector<1x16xf32>
    %94 = vector.broadcast %92 : vector<16x1xf32> to vector<16x16xf32>
    %95 = vector.broadcast %93 : vector<1x16xf32> to vector<16x16xf32>
    %96 = arith.addf %94, %95 : vector<16x16xf32>
    %cst_30 = arith.constant 0.000000e+00 : f32
    %97 = vector.broadcast %cst_30 : f32 to vector<16x16xf32>
    %98 = arith.cmpf ogt, %96, %97 : vector<16x16xf32>
    %cst_31 = arith.constant 2.000000e-01 : f32
    %99 = vector.broadcast %cst_31 : f32 to vector<16x16xf32>
    %100 = arith.mulf %99, %96 : vector<16x16xf32>
    %101 = arith.select %98, %96, %100 : vector<16x16xi1>, vector<16x16xf32>
    %cst_32 = arith.constant -1.000000e+30 : f32
    %102 = vector.broadcast %cst_32 : f32 to vector<16x16xf32>
    %103 = arith.select %4, %101, %102 : vector<16x16xi1>, vector<16x16xf32>
    %cst_33 = arith.constant dense<0xFF800000> : vector<16xf32>
    %104 = vector.multi_reduction <maximumf>, %103, %cst_33 [1] : vector<16x16xf32> to vector<16xf32>
    %105 = vector.shape_cast %104 : vector<16xf32> to vector<16x1xf32>
    %106 = vector.broadcast %105 : vector<16x1xf32> to vector<16x16xf32>
    %107 = arith.subf %103, %106 : vector<16x16xf32>
    %108 = math.exp %107 : vector<16x16xf32>
    %cst_34 = arith.constant dense<0.000000e+00> : vector<16xf32>
    %109 = vector.multi_reduction <add>, %108, %cst_34 [1] : vector<16x16xf32> to vector<16xf32>
    %110 = vector.shape_cast %109 : vector<16xf32> to vector<16x1xf32>
    %cst_35 = arith.constant 1.000000e-30 : f32
    %111 = vector.broadcast %cst_35 : f32 to vector<16x1xf32>
    %112 = arith.maximumf %110, %111 : vector<16x1xf32>
    %113 = arith.truncf %108 : vector<16x16xf32> to vector<16x16xbf16>
    %114 = vector.extract_strided_slice %10 {offsets = [0, 24], sizes = [16, 8], strides = [1, 1]} : vector<16x32xbf16> to vector<16x8xbf16>
    %cst_36 = arith.constant dense<0.000000e+00> : vector<16x8xf32>
    %115 = tpu.matmul %113, %114, %cst_36 {dimension_numbers = #tpu.dot_dimension_numbers<[1], [0], [0], [1], [0, 0, 1, 1], [], []>} : vector<16x16xbf16>, vector<16x8xbf16>, vector<16x8xf32> -> vector<16x8xf32>
    %116 = tpu.reciprocal %112 {approx = true} : vector<16x1xf32> -> vector<16x1xf32>
    %117 = vector.broadcast %116 : vector<16x1xf32> to vector<16x8xf32>
    %118 = arith.mulf %115, %117 : vector<16x8xf32>
    %119 = tpu.concatenate %37, %64, %91, %118 in 1 : vector<16x8xf32>, vector<16x8xf32>, vector<16x8xf32>, vector<16x8xf32> -> vector<16x32xf32>
    %c0_37 = arith.constant 0 : index
    %c0_38 = arith.constant 0 : index
    %120 = vector.load %arg5[%c0_37, %c0_38] : memref<1x32xf32, #tpu.memory_space<vmem>>, vector<1x32xf32>
    %121 = vector.broadcast %120 : vector<1x32xf32> to vector<16x32xf32>
    %122 = arith.addf %119, %121 : vector<16x32xf32>
    %cst_39 = arith.constant 0.000000e+00 : f32
    %123 = vector.broadcast %cst_39 : f32 to vector<16x32xf32>
    %124 = arith.cmpf ogt, %122, %123 : vector<16x32xf32>
    %125 = math.exp %122 : vector<16x32xf32>
    %cst_40 = arith.constant 1.000000e+00 : f32
    %126 = vector.broadcast %cst_40 : f32 to vector<16x32xf32>
    %127 = arith.subf %125, %126 : vector<16x32xf32>
    %128 = arith.select %124, %122, %127 : vector<16x32xi1>, vector<16x32xf32>
    %129 = arith.truncf %128 : vector<16x32xf32> to vector<16x32xbf16>
    %c0_41 = arith.constant 0 : index
    %c0_42 = arith.constant 0 : index
    %130 = vector.load %arg6[%c0_41, %c0_42] : memref<32x5xbf16, #tpu.memory_space<vmem>>, vector<32x5xbf16>
    %cst_43 = arith.constant dense<0.000000e+00> : vector<16x5xf32>
    %131 = tpu.matmul %129, %130, %cst_43 {dimension_numbers = #tpu.dot_dimension_numbers<[1], [0], [0], [1], [0, 0, 1, 1], [], []>} : vector<16x32xbf16>, vector<32x5xbf16>, vector<16x5xf32> -> vector<16x5xf32>
    %c0_44 = arith.constant 0 : index
    %c0_45 = arith.constant 0 : index
    %132 = vector.load %arg7[%c0_44, %c0_45] : memref<1x32xbf16, #tpu.memory_space<vmem>>, vector<1x32xbf16>
    %cst_46 = arith.constant dense<0.000000e+00> : vector<1x16xf32>
    %133 = tpu.matmul %132, %129, %cst_46 {dimension_numbers = #tpu.dot_dimension_numbers<[1], [1], [0], [0], [0, 0, 1, 0], [], []>} : vector<1x32xbf16>, vector<16x32xbf16>, vector<1x16xf32> -> vector<1x16xf32>
    %134 = vector.extract_strided_slice %131 {offsets = [0, 0], sizes = [16, 4], strides = [1, 1]} : vector<16x5xf32> to vector<16x4xf32>
    %135 = vector.extract_strided_slice %131 {offsets = [0, 4], sizes = [16, 1], strides = [1, 1]} : vector<16x5xf32> to vector<16x1xf32>
    %136 = vector.broadcast %135 : vector<16x1xf32> to vector<16x16xf32>
    %137 = vector.broadcast %133 : vector<1x16xf32> to vector<16x16xf32>
    %138 = arith.addf %136, %137 : vector<16x16xf32>
    %cst_47 = arith.constant 0.000000e+00 : f32
    %139 = vector.broadcast %cst_47 : f32 to vector<16x16xf32>
    %140 = arith.cmpf ogt, %138, %139 : vector<16x16xf32>
    %cst_48 = arith.constant 2.000000e-01 : f32
    %141 = vector.broadcast %cst_48 : f32 to vector<16x16xf32>
    %142 = arith.mulf %141, %138 : vector<16x16xf32>
    %143 = arith.select %140, %138, %142 : vector<16x16xi1>, vector<16x16xf32>
    %cst_49 = arith.constant -1.000000e+30 : f32
    %144 = vector.broadcast %cst_49 : f32 to vector<16x16xf32>
    %145 = arith.select %4, %143, %144 : vector<16x16xi1>, vector<16x16xf32>
    %cst_50 = arith.constant dense<0xFF800000> : vector<16xf32>
    %146 = vector.multi_reduction <maximumf>, %145, %cst_50 [1] : vector<16x16xf32> to vector<16xf32>
    %147 = vector.shape_cast %146 : vector<16xf32> to vector<16x1xf32>
    %148 = vector.broadcast %147 : vector<16x1xf32> to vector<16x16xf32>
    %149 = arith.subf %145, %148 : vector<16x16xf32>
    %150 = math.exp %149 : vector<16x16xf32>
    %cst_51 = arith.constant dense<0.000000e+00> : vector<16xf32>
    %151 = vector.multi_reduction <add>, %150, %cst_51 [1] : vector<16x16xf32> to vector<16xf32>
    %152 = vector.shape_cast %151 : vector<16xf32> to vector<16x1xf32>
    %cst_52 = arith.constant 1.000000e-30 : f32
    %153 = vector.broadcast %cst_52 : f32 to vector<16x1xf32>
    %154 = arith.maximumf %152, %153 : vector<16x1xf32>
    %155 = arith.truncf %150 : vector<16x16xf32> to vector<16x16xbf16>
    %156 = arith.truncf %134 : vector<16x4xf32> to vector<16x4xbf16>
    %cst_53 = arith.constant dense<0.000000e+00> : vector<16x4xf32>
    %157 = tpu.matmul %155, %156, %cst_53 {dimension_numbers = #tpu.dot_dimension_numbers<[1], [0], [0], [1], [0, 0, 1, 1], [], []>} : vector<16x16xbf16>, vector<16x4xbf16>, vector<16x4xf32> -> vector<16x4xf32>
    %158 = tpu.reciprocal %154 {approx = true} : vector<16x1xf32> -> vector<16x1xf32>
    %159 = vector.broadcast %158 : vector<16x1xf32> to vector<16x4xf32>
    %160 = arith.mulf %157, %159 : vector<16x4xf32>
    %c0_54 = arith.constant 0 : index
    %c0_55 = arith.constant 0 : index
    %161 = vector.load %arg8[%c0_54, %c0_55] : memref<1x4xf32, #tpu.memory_space<vmem>>, vector<1x4xf32>
    %162 = vector.broadcast %161 : vector<1x4xf32> to vector<16x4xf32>
    %163 = arith.addf %160, %162 : vector<16x4xf32>
    %cst_56 = arith.constant dense<0xFF800000> : vector<16xf32>
    %164 = vector.multi_reduction <maximumf>, %163, %cst_56 [1] : vector<16x4xf32> to vector<16xf32>
    %165 = vector.shape_cast %164 : vector<16xf32> to vector<16x1xf32>
    %166 = vector.broadcast %165 : vector<16x1xf32> to vector<16x4xf32>
    %167 = arith.subf %163, %166 : vector<16x4xf32>
    %168 = math.exp %167 : vector<16x4xf32>
    %cst_57 = arith.constant dense<0.000000e+00> : vector<16xf32>
    %169 = vector.multi_reduction <add>, %168, %cst_57 [1] : vector<16x4xf32> to vector<16xf32>
    %170 = vector.shape_cast %169 : vector<16xf32> to vector<16x1xf32>
    %171 = math.log %170 : vector<16x1xf32>
    %172 = vector.broadcast %171 : vector<16x1xf32> to vector<16x4xf32>
    %173 = arith.subf %167, %172 : vector<16x4xf32>
    %c0_58 = arith.constant 0 : index
    %c0_59 = arith.constant 0 : index
    %174 = vector.load %arg9[%c0_58, %c0_59] : memref<16x4xf32, #tpu.memory_space<vmem>>, vector<16x4xf32>
    tpu.vector_store %arg9[%c0_58, %c0_59], %173 {strides = array<i32>} : memref<16x4xf32, #tpu.memory_space<vmem>>, vector<16x4xf32>,
    return
  }
  func.func @transform_0(%arg0: i32) -> (i32, i32) {
    %c0_i32 = arith.constant 0 : i32
    %c0_i32_0 = arith.constant 0 : i32
    %c0_i32_1 = arith.constant 0 : i32
    return %c0_i32, %c0_i32_0 : i32, i32
  }
  func.func @transform_1(%arg0: i32) -> (i32, i32) {
    %c0_i32 = arith.constant 0 : i32
    %c0_i32_0 = arith.constant 0 : i32
    %c0_i32_1 = arith.constant 0 : i32
    return %c0_i32, %c0_i32_0 : i32, i32
  }
  func.func @transform_2(%arg0: i32) -> (i32, i32) {
    %c0_i32 = arith.constant 0 : i32
    %c0_i32_0 = arith.constant 0 : i32
    %c0_i32_1 = arith.constant 0 : i32
    return %c0_i32, %c0_i32_0 : i32, i32
  }
  func.func @transform_3(%arg0: i32) -> (i32, i32) {
    %c0_i32 = arith.constant 0 : i32
    %c0_i32_0 = arith.constant 0 : i32
    %c0_i32_1 = arith.constant 0 : i32
    return %c0_i32, %c0_i32_0 : i32, i32
  }
  func.func @transform_4(%arg0: i32) -> (i32, i32) {
    %c0_i32 = arith.constant 0 : i32
    %c0_i32_0 = arith.constant 0 : i32
    %c0_i32_1 = arith.constant 0 : i32
    return %c0_i32, %c0_i32_0 : i32, i32
  }
  func.func @transform_5(%arg0: i32) -> (i32, i32) {
    %c0_i32 = arith.constant 0 : i32
    %c0_i32_0 = arith.constant 0 : i32
    %c0_i32_1 = arith.constant 0 : i32
    return %c0_i32, %c0_i32_0 : i32, i32
  }
  func.func @transform_6(%arg0: i32) -> (i32, i32) {
    %c0_i32 = arith.constant 0 : i32
    %c0_i32_0 = arith.constant 0 : i32
    %c0_i32_1 = arith.constant 0 : i32
    return %c0_i32, %c0_i32_0 : i32, i32
  }
  func.func @transform_7(%arg0: i32) -> (i32, i32) {
    %c0_i32 = arith.constant 0 : i32
    %c0_i32_0 = arith.constant 0 : i32
    %c0_i32_1 = arith.constant 0 : i32
    return %c0_i32, %c0_i32_0 : i32, i32
  }
  func.func @transform_8(%arg0: i32) -> (i32, i32) {
    %c0_i32 = arith.constant 0 : i32
    %c0_i32_0 = arith.constant 0 : i32
    %c0_i32_1 = arith.constant 0 : i32
    return %c0_i32, %c0_i32_0 : i32, i32
  }
}

</mosaic_0001>

<llo_original>
// kernel: gat_model_forward.1
$region0: #{gat_model_forward.1}
  #allocation0 [shape = 'u32[]', space=smem, size = 0x4, offset = 0x4, fixed_abs, tag = 'smem constant byte address 0x4 - core index']
  #allocation1 [shape = 'u32[72,128]{1,0:T(1,128)}', space=vmem, size = 0x9000, scoped, tag = 'internal scratch']
  %s0 = inlined_call_operand.vmem [shape: f32[16,8], index: 0, kind: input, shape index: {}]
  %s1 = inlined_call_operand.vmem [shape: f32[16,16], index: 1, kind: input, shape index: {}]
  %s2 = inlined_call_operand.vmem [shape: bf16[8,36], index: 2, kind: input, shape index: {}]
  %s3 = inlined_call_operand.vmem [shape: bf16[4,8], index: 3, kind: input, shape index: {}]
  %s4 = inlined_call_operand.vmem [shape: f32[1,32], index: 4, kind: input, shape index: {}]
  %s5 = inlined_call_operand.vmem [shape: bf16[32,5], index: 5, kind: input, shape index: {}]
  %s6 = inlined_call_operand.vmem [shape: bf16[1,32], index: 6, kind: input, shape index: {}]
  %s7 = inlined_call_operand.vmem [shape: f32[1,4], index: 7, kind: input, shape index: {}]
  %s8 = inlined_call_operand.vmem [shape: f32[16,4], index: 8, kind: output, shape index: {}]
  %s9 = sld [smem:[#allocation0]]
  $region42: #{gat_model_forward.1} parent=0
    _
  %s11 = ssub.s32 1, %s9
  %s12 = scalar_select 0, %s11, %s9
  // Predicated region
  $region2: #{gat_model_forward.1} parent=0 // pred_check
    _
  $region3: #{gat_model_forward.1} parent=0 // pred_check_branch
    %14 = sbr.rel (0) target = $region5
  $region4: #{gat_model_forward.1} parent=0 // pred_region
    _
  $region5: #{gat_model_forward.1} parent=0 // pred_fallthru
    _
  // Predicated region
  $region6: #{gat_model_forward.1} parent=0 // pred_check
    _
  $region7: #{gat_model_forward.1} parent=0 // pred_check_branch
    %16 = sbr.rel (0) target = $region9
  $region8: #{gat_model_forward.1} parent=0 // pred_region
    _
  $region9: #{gat_model_forward.1} parent=0 // pred_fallthru
    _
  // Predicated region
  $region10: #{gat_model_forward.1} parent=0 // pred_check
    _
  $region11: #{gat_model_forward.1} parent=0 // pred_check_branch
    %18 = sbr.rel (0) target = $region13
  $region12: #{gat_model_forward.1} parent=0 // pred_region
    _
  $region13: #{gat_model_forward.1} parent=0 // pred_fallthru
    _
  // Predicated region
  $region14: #{gat_model_forward.1} parent=0 // pred_check
    _
  $region15: #{gat_model_forward.1} parent=0 // pred_check_branch
    %20 = sbr.rel (0) target = $region17
  $region16: #{gat_model_forward.1} parent=0 // pred_region
    _
  $region17: #{gat_model_forward.1} parent=0 // pred_fallthru
    _
  // Predicated region
  $region18: #{gat_model_forward.1} parent=0 // pred_check
    _
  $region19: #{gat_model_forward.1} parent=0 // pred_check_branch
    %22 = sbr.rel (0) target = $region21
  $region20: #{gat_model_forward.1} parent=0 // pred_region
    _
  $region21: #{gat_model_forward.1} parent=0 // pred_fallthru
    _
  // Predicated region
  $region22: #{gat_model_forward.1} parent=0 // pred_check
    _
  $region23: #{gat_model_forward.1} parent=0 // pred_check_branch
    %24 = sbr.rel (0) target = $region25
  $region24: #{gat_model_forward.1} parent=0 // pred_region
    _
  $region25: #{gat_model_forward.1} parent=0 // pred_fallthru
    _
  // Predicated region
  $region26: #{gat_model_forward.1} parent=0 // pred_check
    _
  $region27: #{gat_model_forward.1} parent=0 // pred_check_branch
    %26 = sbr.rel (0) target = $region29
  $region28: #{gat_model_forward.1} parent=0 // pred_region
    _
  $region29: #{gat_model_forward.1} parent=0 // pred_fallthru
    _
  // Predicated region
  $region30: #{gat_model_forward.1} parent=0 // pred_check
    _
  $region31: #{gat_model_forward.1} parent=0 // pred_check_branch
    %28 = sbr.rel (0) target = $region33
  $region32: #{gat_model_forward.1} parent=0 // pred_region
    _
  $region33: #{gat_model_forward.1} parent=0 // pred_fallthru
    _
  %v30 = vld [vmem:[%s0] sm:$0xff]
  %v31 = vld [vmem:[%s0 + $0x8] sm:$0xff]
  %v32 = vpack.c.bf16 %v31, %v30
  %v33 = vld [vmem:[%s1] sm:$0xff]
  %v34 = vld [vmem:[%s1 + $0x8] sm:$0xff]
  %vm35 = vcmp.gt.f32.partialorder %v33, 0.0
  %vm36 = vcmp.gt.f32.partialorder %v34, 0.0
  %v37 = vld [vmem:[%s2] sm:$0xf]
  %vm38 = vcmask 64512
  %v40 = vsel %vm38, %v32, 0
  %vm42 = vcmask 1043456
  %v44 = vsel %vm42, %v37, 0
  %46 = vmatpush.bf16.msra.mxu0 0
  %47 = vmatpush.bf16.msra.mxu0 0
  %48 = vmatpush.bf16.msra.mxu0 0
  %49 = vmatpush.bf16.msra.mxu0 0
  %50 = vmatpush.bf16.msra.mxu0 0
  %51 = vmatpush.bf16.msra.mxu0 0
  %52 = vmatpush.bf16.msra.mxu0 0
  %53 = vmatpush.bf16.msra.mxu0 %v44
  %54 = vmatmul.bf16.gmra.mxu0 %v40
  %v55 = vpop.f32.mrf.mxu0
  %v56 = vadd.f32 0.0, %v55
  %v57 = vpop.f32.mrf.mxu0
  %v58 = vadd.f32 0.0, %v57
  %59 = vdwg.mxu0
  %v60 = vld [vmem:[%s3] sm:$0x3]
  %v62 = vsel %vm38, %v60, 0
  %64 = vmatpush.bf16.xpose.msra.mxu0 0
  %65 = vmatpush.bf16.xpose.msra.mxu0 0
  %66 = vmatpush.bf16.xpose.msra.mxu0 0
  %67 = vmatpush.bf16.xpose.msra.mxu0 0
  %68 = vmatpush.bf16.xpose.msra.mxu0 0
  %69 = vmatpush.bf16.xpose.msra.mxu0 0
  %70 = vmatpush.bf16.xpose.msra.mxu0 0
  %71 = vmatpush.bf16.xpose.msra.mxu0 %v40
  %72 = vmatmul.bf16.gmra.mxu0 %v62
  %v73 = vpop.f32.mrf.mxu0
  %v74 = vadd.f32 0.0, %v73
  %v75 = vpop.f32.mrf.mxu0
  %76 = vdwg.mxu0
  %v77 = vpack.c.bf16 %v56, %v56
  %v78 = vpack.c.bf16 %v58, %v58
  %80 = vset.pattern.permute.xlu0 32
  %81 = vperm.xlu0 %80, %v56
  %v82 = vpop.permute.xlu0 %81
  %85 = vset.pattern.permute.xlu0 32
  %86 = vperm.xlu0 %85, %v58
  %v87 = vpop.permute.xlu0 %86
  %v89 = vperm.slane %v74, 0
  %v90 = vadd.f32 %v82, %v89
  %v91 = vadd.f32 %v87, %v89
  %vm92 = vcmp.gt.f32.partialorder %v90, 0.0
  %vm93 = vcmp.gt.f32.partialorder %v91, 0.0
  %v94 = vmul.f32 %v90, 0.2
  %v95 = vmul.f32 %v91, 0.2
  %v96 = vsel %vm92, %v90, %v94
  %v97 = vsel %vm93, %v91, %v95
  %v98 = vsel %vm35, %v96, -1e+30
  %v99 = vsel %vm36, %v97, -1e+30
  %vm100 = vcmask 130048
  %v101 = vsel %vm100, %v98, -inf
  %102 = vmax.xlane.f32.xlu0 %v101
  %v103 = vpop.xlane.xlu0 %102
  %v104 = vsel %vm100, %v99, -inf
  %105 = vmax.xlane.f32.xlu0 %v104
  %v106 = vpop.xlane.xlu0 %105
  %v107 = vsub.f32 %v98, %v103
  %v108 = vsub.f32 %v99, %v106
  %v109 = vmul.f32 %v107, 1.442695
  %v110 = vpow.pop %v109
  %v111 = vmul.f32 %v108, 1.442695
  %v112 = vpow.pop %v111
  %v113 = vsel %vm100, %v110, 0.0
  %114 = vadd.xlane.f32.xlu0 %v113
  %v115 = vpop.xlane.xlu0 %114
  %v116 = vsel %vm100, %v112, 0.0
  %117 = vadd.xlane.f32.xlu0 %v116
  %v118 = vpop.xlane.xlu0 %117
  %v119 = vmax.f32 %v115, 1e-30
  %v120 = vmax.f32 %v118, 1e-30
  %v121 = vpack.c.bf16 %v112, %v110
  %v124 = vunpack.c.l.b16 %v77
  %v125 = vunpack.c.l.b16 %v78
  %v126 = vpack.c.b16 %v125, %v124
  %v129 = vsel %vm100, %v121, 0
  %131 = vmatpush.bf16.msra.mxu0 0
  %132 = vmatpush.bf16.msra.mxu0 0
  %133 = vmatpush.bf16.msra.mxu0 0
  %134 = vmatpush.bf16.msra.mxu0 0
  %135 = vmatpush.bf16.msra.mxu0 0
  %136 = vmatpush.bf16.msra.mxu0 0
  %137 = vmatpush.bf16.msra.mxu0 0
  %138 = vmatpush.bf16.msra.mxu0 %v126
  %139 = vmatmul.bf16.gmra.mxu0 %v129
  %v140 = vpop.f32.mrf.mxu0
  %v141 = vadd.f32 0.0, %v140
  %v142 = vpop.f32.mrf.mxu0
  %v143 = vadd.f32 0.0, %v142
  %144 = vdwg.mxu0
  %v145 = vrcp.pop %v119
  %v146 = vrcp.pop %v120
  %v147 = vmul.f32 %v141, %v145
  %v148 = vmul.f32 %v143, %v146
  %149 = vset.pattern.permute.xlu0 33
  %150 = vperm.xlu0 %149, %v56
  %v151 = vpop.permute.xlu0 %150
  %153 = vset.pattern.permute.xlu0 33
  %154 = vperm.xlu0 %153, %v58
  %v155 = vpop.permute.xlu0 %154
  %v157 = vperm.slane %v74, 1
  %v158 = vadd.f32 %v151, %v157
  %v159 = vadd.f32 %v155, %v157
  %vm160 = vcmp.gt.f32.partialorder %v158, 0.0
  %vm161 = vcmp.gt.f32.partialorder %v159, 0.0
  %v162 = vmul.f32 %v158, 0.2
  %v163 = vmul.f32 %v159, 0.2
  %v164 = vsel %vm160, %v158, %v162
  %v165 = vsel %vm161, %v159, %v163
  %v166 = vsel %vm35, %v164, -1e+30
  %v167 = vsel %vm36, %v165, -1e+30
  %v168 = vsel %vm100, %v166, -inf
  %169 = vmax.xlane.f32.xlu0 %v168
  %v170 = vpop.xlane.xlu0 %169
  %v171 = vsel %vm100, %v167, -inf
  %172 = vmax.xlane.f32.xlu0 %v171
  %v173 = vpop.xlane.xlu0 %172
  %v174 = vsub.f32 %v166, %v170
  %v175 = vsub.f32 %v167, %v173
  %v176 = vmul.f32 %v174, 1.442695
  %v177 = vpow.pop %v176
  %v178 = vmul.f32 %v175, 1.442695
  %v179 = vpow.pop %v178
  %v180 = vsel %vm100, %v177, 0.0
  %181 = vadd.xlane.f32.xlu0 %v180
  %v182 = vpop.xlane.xlu0 %181
  %v183 = vsel %vm100, %v179, 0.0
  %184 = vadd.xlane.f32.xlu0 %v183
  %v185 = vpop.xlane.xlu0 %184
  %v186 = vmax.f32 %v182, 1e-30
  %v187 = vmax.f32 %v185, 1e-30
  %v188 = vpack.c.bf16 %v179, %v177
  %189 = vrot.lane.b32.xlu0 %v126, 120
  %v190 = vpop.permute.xlu0 %189
  %v193 = vsel %vm100, %v188, 0
  %195 = vmatpush.bf16.msra.mxu0 0
  %196 = vmatpush.bf16.msra.mxu0 0
  %197 = vmatpush.bf16.msra.mxu0 0
  %198 = vmatpush.bf16.msra.mxu0 0
  %199 = vmatpush.bf16.msra.mxu0 0
  %200 = vmatpush.bf16.msra.mxu0 0
  %201 = vmatpush.bf16.msra.mxu0 0
  %202 = vmatpush.bf16.msra.mxu0 %v190
  %203 = vmatmul.bf16.gmra.mxu0 %v193
  %v204 = vpop.f32.mrf.mxu0
  %v205 = vadd.f32 0.0, %v204
  %v206 = vpop.f32.mrf.mxu0
  %v207 = vadd.f32 0.0, %v206
  %208 = vdwg.mxu0
  %v209 = vrcp.pop %v186
  %v210 = vrcp.pop %v187
  %v211 = vmul.f32 %v205, %v209
  %v212 = vmul.f32 %v207, %v210
  %213 = vset.pattern.permute.xlu0 34
  %214 = vperm.xlu0 %213, %v56
  %v215 = vpop.permute.xlu0 %214
  %217 = vset.pattern.permute.xlu0 34
  %218 = vperm.xlu0 %217, %v58
  %v219 = vpop.permute.xlu0 %218
  %v221 = vperm.slane %v74, 2
  %v222 = vadd.f32 %v215, %v221
  %v223 = vadd.f32 %v219, %v221
  %vm224 = vcmp.gt.f32.partialorder %v222, 0.0
  %vm225 = vcmp.gt.f32.partialorder %v223, 0.0
  %v226 = vmul.f32 %v222, 0.2
  %v227 = vmul.f32 %v223, 0.2
  %v228 = vsel %vm224, %v222, %v226
  %v229 = vsel %vm225, %v223, %v227
  %v230 = vsel %vm35, %v228, -1e+30
  %v231 = vsel %vm36, %v229, -1e+30
  %v232 = vsel %vm100, %v230, -inf
  %233 = vmax.xlane.f32.xlu0 %v232
  %v234 = vpop.xlane.xlu0 %233
  %v235 = vsel %vm100, %v231, -inf
  %236 = vmax.xlane.f32.xlu0 %v235
  %v237 = vpop.xlane.xlu0 %236
  %v238 = vsub.f32 %v230, %v234
  %v239 = vsub.f32 %v231, %v237
  %v240 = vmul.f32 %v238, 1.442695
  %v241 = vpow.pop %v240
  %v242 = vmul.f32 %v239, 1.442695
  %v243 = vpow.pop %v242
  %v244 = vsel %vm100, %v241, 0.0
  %245 = vadd.xlane.f32.xlu0 %v244
  %v246 = vpop.xlane.xlu0 %245
  %v247 = vsel %vm100, %v243, 0.0
  %248 = vadd.xlane.f32.xlu0 %v247
  %v249 = vpop.xlane.xlu0 %248
  %v250 = vmax.f32 %v246, 1e-30
  %v251 = vmax.f32 %v249, 1e-30
  %v252 = vpack.c.bf16 %v243, %v241
  %253 = vrot.lane.b32.xlu0 %v126, 112
  %v254 = vpop.permute.xlu0 %253
  %v257 = vsel %vm100, %v252, 0
  %259 = vmatpush.bf16.msra.mxu0 0
  %260 = vmatpush.bf16.msra.mxu0 0
  %261 = vmatpush.bf16.msra.mxu0 0
  %262 = vmatpush.bf16.msra.mxu0 0
  %263 = vmatpush.bf16.msra.mxu0 0
  %264 = vmatpush.bf16.msra.mxu0 0
  %265 = vmatpush.bf16.msra.mxu0 0
  %266 = vmatpush.bf16.msra.mxu0 %v254
  %267 = vmatmul.bf16.gmra.mxu0 %v257
  %v268 = vpop.f32.mrf.mxu0
  %v269 = vadd.f32 0.0, %v268
  %v270 = vpop.f32.mrf.mxu0
  %v271 = vadd.f32 0.0, %v270
  %272 = vdwg.mxu0
  %v273 = vrcp.pop %v250
  %v274 = vrcp.pop %v251
  %v275 = vmul.f32 %v269, %v273
  %v276 = vmul.f32 %v271, %v274
  %277 = vset.pattern.permute.xlu0 35
  %278 = vperm.xlu0 %277, %v56
  %v279 = vpop.permute.xlu0 %278
  %281 = vset.pattern.permute.xlu0 35
  %282 = vperm.xlu0 %281, %v58
  %v283 = vpop.permute.xlu0 %282
  %v285 = vperm.slane %v74, 3
  %v286 = vadd.f32 %v279, %v285
  %v287 = vadd.f32 %v283, %v285
  %vm288 = vcmp.gt.f32.partialorder %v286, 0.0
  %vm289 = vcmp.gt.f32.partialorder %v287, 0.0
  %v290 = vmul.f32 %v286, 0.2
  %v291 = vmul.f32 %v287, 0.2
  %v292 = vsel %vm288, %v286, %v290
  %v293 = vsel %vm289, %v287, %v291
  %v294 = vsel %vm35, %v292, -1e+30
  %v295 = vsel %vm36, %v293, -1e+30
  %v296 = vsel %vm100, %v294, -inf
  %297 = vmax.xlane.f32.xlu0 %v296
  %v298 = vpop.xlane.xlu0 %297
  %v299 = vsel %vm100, %v295, -inf
  %300 = vmax.xlane.f32.xlu0 %v299
  %v301 = vpop.xlane.xlu0 %300
  %v302 = vsub.f32 %v294, %v298
  %v303 = vsub.f32 %v295, %v301
  %v304 = vmul.f32 %v302, 1.442695
  %v305 = vpow.pop %v304
  %v306 = vmul.f32 %v303, 1.442695
  %v307 = vpow.pop %v306
  %v308 = vsel %vm100, %v305, 0.0
  %309 = vadd.xlane.f32.xlu0 %v308
  %v310 = vpop.xlane.xlu0 %309
  %v311 = vsel %vm100, %v307, 0.0
  %312 = vadd.xlane.f32.xlu0 %v311
  %v313 = vpop.xlane.xlu0 %312
  %v314 = vmax.f32 %v310, 1e-30
  %v315 = vmax.f32 %v313, 1e-30
  %v316 = vpack.c.bf16 %v307, %v305
  %317 = vrot.lane.b32.xlu0 %v126, 104
  %v318 = vpop.permute.xlu0 %317
  %v321 = vsel %vm100, %v316, 0
  %323 = vmatpush.bf16.msra.mxu0 0
  %324 = vmatpush.bf16.msra.mxu0 0
  %325 = vmatpush.bf16.msra.mxu0 0
  %326 = vmatpush.bf16.msra.mxu0 0
  %327 = vmatpush.bf16.msra.mxu0 0
  %328 = vmatpush.bf16.msra.mxu0 0
  %329 = vmatpush.bf16.msra.mxu0 0
  %330 = vmatpush.bf16.msra.mxu0 %v318
  %331 = vmatmul.bf16.gmra.mxu0 %v321
  %v332 = vpop.f32.mrf.mxu0
  %v333 = vadd.f32 0.0, %v332
  %v334 = vpop.f32.mrf.mxu0
  %v335 = vadd.f32 0.0, %v334
  %336 = vdwg.mxu0
  %v337 = vrcp.pop %v314
  %v338 = vrcp.pop %v315
  %v339 = vmul.f32 %v333, %v337
  %v340 = vmul.f32 %v335, %v338
  %343 = vrot.lane.b32.xlu0 %v211, 8
  %v344 = vpop.permute.xlu0 %343
  %345 = vrot.lane.b32.xlu0 %v212, 8
  %v346 = vpop.permute.xlu0 %345
  %351 = vrot.lane.b32.xlu0 %v275, 16
  %v352 = vpop.permute.xlu0 %351
  %353 = vrot.lane.b32.xlu0 %v276, 16
  %v354 = vpop.permute.xlu0 %353
  %359 = vrot.lane.b32.xlu0 %v339, 24
  %v360 = vpop.permute.xlu0 %359
  %361 = vrot.lane.b32.xlu0 %v340, 24
  %v362 = vpop.permute.xlu0 %361
  %v365 = vsel %vm38, %v147, %v344
  %v366 = vsel %vm38, %v148, %v346
  %v367 = vsel %vm100, %v365, %v352
  %v368 = vsel %vm100, %v366, %v354
  %vm369 = vcmask 195584
  %v370 = vsel %vm369, %v367, %v360
  %v371 = vsel %vm369, %v368, %v362
  %v372 = vld [vmem:[%s4] sm:$0x1]
  %v374 = vperm.slane %v372, 0
  %v376 = vadd.f32 %v370, %v374
  %v377 = vadd.f32 %v371, %v374
  %vm378 = vcmp.gt.f32.partialorder %v376, 0.0
  %vm379 = vcmp.gt.f32.partialorder %v377, 0.0
  %v380 = vmul.f32 %v376, 1.442695
  %v381 = vpow.pop %v380
  %v382 = vmul.f32 %v377, 1.442695
  %v383 = vpow.pop %v382
  %v384 = vsub.f32 %v381, 1.0
  %v385 = vsub.f32 %v383, 1.0
  %v386 = vsel %vm378, %v376, %v384
  %v387 = vsel %vm379, %v377, %v385
  %v388 = vpack.c.bf16 %v387, %v386
  %v389 = vld [vmem:[%s5] sm:$0xf]
  %v390 = vld [vmem:[%s5 + $0x4] sm:$0xf]
  %v391 = vld [vmem:[%s5 + $0x8] sm:$0xf]
  %v392 = vld [vmem:[%s5 + $0xc] sm:$0xf]
  %v397 = vunpack.c.l.b16 %v389
  %v398 = vunpack.c.l.b16 %v390
  %v399 = vunpack.c.l.b16 %v391
  %v400 = vunpack.c.l.b16 %v392
  %v401 = vpack.c.b16 %v398, %v397
  %v402 = vpack.c.b16 %v400, %v399
  %vm405 = vcmask 261120
  %v407 = vsel %vm405, %v388, 0
  %409 = vmatpush.bf16.msra.mxu0 0
  %410 = vmatpush.bf16.msra.mxu0 0
  %411 = vmatpush.bf16.msra.mxu0 0
  %412 = vmatpush.bf16.msra.mxu0 0
  %413 = vmatpush.bf16.msra.mxu0 0
  %414 = vmatpush.bf16.msra.mxu0 0
  %415 = vmatpush.bf16.msra.mxu0 %v402
  %416 = vmatpush.bf16.msra.mxu0 %v401
  %417 = vmatmul.bf16.gmra.mxu0 %v407
  %v418 = vpop.f32.mrf.mxu0
  %v419 = vadd.f32 0.0, %v418
  %v420 = vpop.f32.mrf.mxu0
  %v421 = vadd.f32 0.0, %v420
  %422 = vdwg.mxu0
  %v423 = vld [vmem:[%s6] sm:$0x1]
  %v425 = vsel %vm405, %v423, 0
  %427 = vmatpush.bf16.xpose.msra.mxu0 0
  %428 = vmatpush.bf16.xpose.msra.mxu0 0
  %429 = vmatpush.bf16.xpose.msra.mxu0 0
  %430 = vmatpush.bf16.xpose.msra.mxu0 0
  %431 = vmatpush.bf16.xpose.msra.mxu0 0
  %432 = vmatpush.bf16.xpose.msra.mxu0 0
  %433 = vmatpush.bf16.xpose.msra.mxu0 0
  %434 = vmatpush.bf16.xpose.msra.mxu0 %v407
  %435 = vmatmul.bf16.gmra.mxu0 %v425
  %v436 = vpop.f32.mrf.mxu0
  %v437 = vadd.f32 0.0, %v436
  %v438 = vpop.f32.mrf.mxu0
  %439 = vdwg.mxu0
  %441 = vset.pattern.permute.xlu0 4
  %442 = vperm.xlu0 %441, %v419
  %v443 = vpop.permute.xlu0 %442
  %446 = vset.pattern.permute.xlu0 4
  %447 = vperm.xlu0 %446, %v421
  %v448 = vpop.permute.xlu0 %447
  %v450 = vperm.slane %v437, 0
  %v451 = vadd.f32 %v443, %v450
  %v452 = vadd.f32 %v448, %v450
  %vm453 = vcmp.gt.f32.partialorder %v451, 0.0
  %vm454 = vcmp.gt.f32.partialorder %v452, 0.0
  %v455 = vmul.f32 %v451, 0.2
  %v456 = vmul.f32 %v452, 0.2
  %v457 = vsel %vm453, %v451, %v455
  %v458 = vsel %vm454, %v452, %v456
  %v459 = vsel %vm35, %v457, -1e+30
  %v460 = vsel %vm36, %v458, -1e+30
  %v461 = vsel %vm100, %v459, -inf
  %462 = vmax.xlane.f32.xlu0 %v461
  %v463 = vpop.xlane.xlu0 %462
  %v464 = vsel %vm100, %v460, -inf
  %465 = vmax.xlane.f32.xlu0 %v464
  %v466 = vpop.xlane.xlu0 %465
  %v467 = vsub.f32 %v459, %v463
  %v468 = vsub.f32 %v460, %v466
  %v469 = vmul.f32 %v467, 1.442695
  %v470 = vpow.pop %v469
  %v471 = vmul.f32 %v468, 1.442695
  %v472 = vpow.pop %v471
  %v473 = vsel %vm100, %v470, 0.0
  %474 = vadd.xlane.f32.xlu0 %v473
  %v475 = vpop.xlane.xlu0 %474
  %v476 = vsel %vm100, %v472, 0.0
  %477 = vadd.xlane.f32.xlu0 %v476
  %v478 = vpop.xlane.xlu0 %477
  %v479 = vmax.f32 %v475, 1e-30
  %v480 = vmax.f32 %v478, 1e-30
  %v481 = vpack.c.bf16 %v472, %v470
  %v482 = vpack.c.bf16 %v421, %v419
  %v484 = vsel %vm100, %v481, 0
  %486 = vmatpush.bf16.msra.mxu0 0
  %487 = vmatpush.bf16.msra.mxu0 0
  %488 = vmatpush.bf16.msra.mxu0 0
  %489 = vmatpush.bf16.msra.mxu0 0
  %490 = vmatpush.bf16.msra.mxu0 0
  %491 = vmatpush.bf16.msra.mxu0 0
  %492 = vmatpush.bf16.msra.mxu0 0
  %493 = vmatpush.bf16.msra.mxu0 %v482
  %494 = vmatmul.bf16.gmra.mxu0 %v484
  %v495 = vpop.f32.mrf.mxu0
  %v496 = vadd.f32 0.0, %v495
  %v497 = vpop.f32.mrf.mxu0
  %v498 = vadd.f32 0.0, %v497
  %499 = vdwg.mxu0
  %v500 = vrcp.pop %v479
  %v501 = vrcp.pop %v480
  %v502 = vmul.f32 %v496, %v500
  %v503 = vmul.f32 %v498, %v501
  %v504 = vld [vmem:[%s7] sm:$0x1]
  %v506 = vperm.slane %v504, 0
  %v508 = vadd.f32 %v502, %v506
  %v509 = vadd.f32 %v503, %v506
  %vm510 = vcmask 31744
  %v511 = vsel %vm510, %v508, -inf
  %512 = vmax.xlane.f32.xlu0 %v511
  %v513 = vpop.xlane.xlu0 %512
  %v514 = vsel %vm510, %v509, -inf
  %515 = vmax.xlane.f32.xlu0 %v514
  %v516 = vpop.xlane.xlu0 %515
  %v517 = vsub.f32 %v508, %v513
  %v518 = vsub.f32 %v509, %v516
  %v519 = vmul.f32 %v517, 1.442695
  %v520 = vpow.pop %v519
  %v521 = vmul.f32 %v518, 1.442695
  %v522 = vpow.pop %v521
  %v523 = vsel %vm510, %v520, 0.0
  %524 = vadd.xlane.f32.xlu0 %v523
  %v525 = vpop.xlane.xlu0 %524
  %v526 = vsel %vm510, %v522, 0.0
  %527 = vadd.xlane.f32.xlu0 %v526
  %v528 = vpop.xlane.xlu0 %527
  %v529 = vlog2.pop %v525
  %v530 = vmul.f32 %v529, 0.6931472
  %v531 = vlog2.pop %v528
  %v532 = vmul.f32 %v531, 0.6931472
  %v533 = vsub.f32 %v517, %v530
  %v534 = vsub.f32 %v518, %v532
  %535 = vst.msk [vmem:[%s8] sm:$0xff] %vm510, %v533
  %536 = vst.msk [vmem:[%s8 + $0x8] sm:$0xff] %vm510, %v534
  // Predicated region
  $region34: #{gat_model_forward.1} parent=0 // pred_check
    _
  $region35: #{gat_model_forward.1} parent=0 // pred_check_branch
    %538 = sbr.rel (0) target = $region37
  $region36: #{gat_model_forward.1} parent=0 // pred_region
    _
  $region37: #{gat_model_forward.1} parent=0 // pred_fallthru
    _
  // Predicated region
  $region38: #{gat_model_forward.1} parent=0 // pred_check
    _
  $region39: #{gat_model_forward.1} parent=0 // pred_check_branch
    %540 = sbr.rel (0) target = $region41
  $region40: #{gat_model_forward.1} parent=0 // pred_region
    _
  $region41: #{gat_model_forward.1} parent=0 // pred_fallthru
    _

</llo_original>
